<compile_context>
chip_gen: v7x
topology: tpu7x:2x2x1
jax: 0.10.0
libtpu: 0.0.40
codegen_flags: <defaults>
</compile_context>

<pallas_src>
import jax
import jax.numpy as jnp
from jax.experimental import pallas as pl
from jax.experimental.pallas import tpu as pltpu

EPS = 1e-5  # PyTorch nn.LayerNorm default


def _layernorm_kernel(x_ref, gamma_ref, beta_ref, o_ref):
    # x_ref, o_ref: (C, tT)   gamma_ref, beta_ref: (C, 1)  (f32)
    x = x_ref[...].astype(jnp.float32)
    inv_c = jnp.float32(1.0 / x.shape[0])

    # Fused single-pass statistics over the channel (sublane) axis.
    s1 = jnp.sum(x, axis=0, keepdims=True)        # (1, tT)
    s2 = jnp.sum(x * x, axis=0, keepdims=True)    # (1, tT)
    mean = s1 * inv_c
    var = jnp.maximum(s2 * inv_c - mean * mean, 0.0)  # biased var, clamp f32 cancellation
    inv = jax.lax.rsqrt(var + EPS)                # (1, tT)

    y = (x - mean) * inv * gamma_ref[...] + beta_ref[...]
    o_ref[...] = y.astype(o_ref.dtype)


def _pick_tile_t(T, C, itemsize):
    """Pick a lane-tile along T: ~2 MiB per (C, tT) buffer, multiple of 128."""
    budget = 2 * 1024 * 1024
    if T <= 128 or C * T * itemsize <= budget:
        return T  # single full-extent block along T (always a legal block dim)
    rows = max(128, (budget // (C * itemsize)) // 128 * 128)
    return int(min(rows, (T // 128) * 128))


def layernorm_bct(x_bct, gamma, beta, *, tile_t=None):
    """x_bct: (B, C, T); gamma, beta: (C,). Returns (B, C, T) (same dtype)."""
    B, C, T = x_bct.shape
    tT = tile_t if tile_t is not None else _pick_tile_t(T, C, x_bct.dtype.itemsize)
    nT = pl.cdiv(T, tT)

    # Hoist the f32 cast; column layout broadcasts over the T (lane) axis.
    gamma_col = gamma.astype(jnp.float32).reshape(C, 1)
    beta_col = beta.astype(jnp.float32).reshape(C, 1)

    return pl.pallas_call(
        _layernorm_kernel,
        out_shape=jax.ShapeDtypeStruct((B, C, T), x_bct.dtype),
        grid_spec=pltpu.PrefetchScalarGridSpec(
            num_scalar_prefetch=0,
            grid=(B, nT),
            in_specs=[
                pl.BlockSpec((pl.Squeezed(), C, tT), lambda b, t: (b, 0, t)),
                pl.BlockSpec((C, 1), lambda b, t: (0, 0)),  # resident, no re-DMA
                pl.BlockSpec((C, 1), lambda b, t: (0, 0)),
            ],
            out_specs=pl.BlockSpec((pl.Squeezed(), C, tT), lambda b, t: (b, 0, t)),
        ),
        compiler_params=pltpu.CompilerParams(
            dimension_semantics=("parallel", "parallel"),
            vmem_limit_bytes=32 * 1024 * 1024,
        ),
    )(x_bct, gamma_col, beta_col)


def _reference(x, gamma, beta):
    # Plain-JAX reference: LayerNorm over the C axis of (B, C, T).
    B, C, T = x.shape
    xf = x.astype(jnp.float32)
    mean = jnp.mean(xf, axis=1, keepdims=True)
    var = jnp.mean((xf - mean) ** 2, axis=1, keepdims=True)
    y = (xf - mean) / jnp.sqrt(var + EPS)
    y = y * gamma.astype(jnp.float32).reshape(1, C, 1) + beta.astype(jnp.float32).reshape(1, C, 1)
    return y.astype(x.dtype)


if __name__ == "__main__":
    key = jax.random.PRNGKey(0)

    # Test 1: small shape matching the module (LayerNorm dim = C).
    B, C, T = 2, 32, 16
    k0, k1 = jax.random.split(key)
    x = jax.random.normal(k0, (B, C, T), dtype=jnp.float32)
    gamma = 1.0 + 0.1 * jnp.arange(C, dtype=jnp.float32)   # deterministic, non-trivial
    beta = 0.01 * jnp.arange(C, dtype=jnp.float32)

    out = jax.block_until_ready(layernorm_bct(x, gamma, beta))
    ref = _reference(x, gamma, beta)
    assert jnp.allclose(out, ref, atol=1e-5, rtol=1e-5)

    # Test 2: T >= 128 with an explicit tile to exercise the T-tiled grid path.
    B2, C2, T2 = 2, 8, 256
    x2 = jax.random.normal(k1, (B2, C2, T2), dtype=jnp.float32)
    gamma2 = jnp.ones((C2,), dtype=jnp.float32)
    beta2 = jnp.zeros((C2,), dtype=jnp.float32)

    out2 = jax.block_until_ready(layernorm_bct(x2, gamma2, beta2, tile_t=128))
    ref2 = _reference(x2, gamma2, beta2)
    assert jnp.allclose(out2, ref2, atol=1e-5, rtol=1e-5)

    print("KERNEL_OK")
</pallas_src>

<mosaic_0001>
module attributes {stable_mosaic.version = 11 : i64} {
  func.func @_layernorm_kernel(%arg0: i32, %arg1: i32, %arg2: memref<1x32x16xf32, #tpu.memory_space<vmem>>, %arg3: memref<32x1xf32, #tpu.memory_space<vmem>>, %arg4: memref<32x1xf32, #tpu.memory_space<vmem>>, %arg5: memref<1x32x16xf32, #tpu.memory_space<vmem>>) attributes {dimension_semantics = [#tpu.dimension_semantics<parallel>, #tpu.dimension_semantics<parallel>], iteration_bounds = array<i64: 2, 1>, scalar_prefetch = 0 : i64, scratch_operands = 0 : i64, tpu.core_type = #tpu.core_type<tc>, window_params = [{transform_indices = @transform_0, window_bounds = array<i64: 1, 32, 16>}, {pipeline_mode = #tpu.pipeline_mode<synchronous>, transform_indices = @transform_1, window_bounds = array<i64: 32, 1>}, {pipeline_mode = #tpu.pipeline_mode<synchronous>, transform_indices = @transform_2, window_bounds = array<i64: 32, 1>}, {transform_indices = @transform_3, window_bounds = array<i64: 1, 32, 16>}]} {
    %c0 = arith.constant 0 : index
    %c0_0 = arith.constant 0 : index
    %c0_1 = arith.constant 0 : index
    %0 = vector.load %arg2[%c0, %c0_0, %c0_1] : memref<1x32x16xf32, #tpu.memory_space<vmem>>, vector<1x32x16xf32>
    %1 = vector.shape_cast %0 : vector<1x32x16xf32> to vector<32x16xf32>
    %cst = arith.constant dense<0.000000e+00> : vector<16xf32>
    %2 = vector.multi_reduction <add>, %1, %cst [0] : vector<32x16xf32> to vector<16xf32>
    %3 = vector.shape_cast %2 : vector<16xf32> to vector<1x16xf32>
    %4 = arith.mulf %1, %1 : vector<32x16xf32>
    %cst_2 = arith.constant dense<0.000000e+00> : vector<16xf32>
    %5 = vector.multi_reduction <add>, %4, %cst_2 [0] : vector<32x16xf32> to vector<16xf32>
    %6 = vector.shape_cast %5 : vector<16xf32> to vector<1x16xf32>
    %cst_3 = arith.constant 3.125000e-02 : f32
    %7 = vector.broadcast %cst_3 : f32 to vector<1x16xf32>
    %8 = arith.mulf %3, %7 : vector<1x16xf32>
    %cst_4 = arith.constant 3.125000e-02 : f32
    %9 = vector.broadcast %cst_4 : f32 to vector<1x16xf32>
    %10 = arith.mulf %6, %9 : vector<1x16xf32>
    %11 = arith.mulf %8, %8 : vector<1x16xf32>
    %12 = arith.subf %10, %11 : vector<1x16xf32>
    %cst_5 = arith.constant 0.000000e+00 : f32
    %13 = vector.broadcast %cst_5 : f32 to vector<1x16xf32>
    %14 = arith.maximumf %12, %13 : vector<1x16xf32>
    %cst_6 = arith.constant 9.99999974E-6 : f32
    %15 = vector.broadcast %cst_6 : f32 to vector<1x16xf32>
    %16 = arith.addf %14, %15 : vector<1x16xf32>
    %17 = math.rsqrt %16 : vector<1x16xf32>
    %18 = vector.broadcast %8 : vector<1x16xf32> to vector<32x16xf32>
    %19 = arith.subf %1, %18 : vector<32x16xf32>
    %20 = vector.broadcast %17 : vector<1x16xf32> to vector<32x16xf32>
    %21 = arith.mulf %19, %20 : vector<32x16xf32>
    %c0_7 = arith.constant 0 : index
    %c0_8 = arith.constant 0 : index
    %22 = vector.load %arg3[%c0_7, %c0_8] : memref<32x1xf32, #tpu.memory_space<vmem>>, vector<32x1xf32>
    %23 = vector.broadcast %22 : vector<32x1xf32> to vector<32x16xf32>
    %24 = arith.mulf %21, %23 : vector<32x16xf32>
    %c0_9 = arith.constant 0 : index
    %c0_10 = arith.constant 0 : index
    %25 = vector.load %arg4[%c0_9, %c0_10] : memref<32x1xf32, #tpu.memory_space<vmem>>, vector<32x1xf32>
    %26 = vector.broadcast %25 : vector<32x1xf32> to vector<32x16xf32>
    %27 = arith.addf %24, %26 : vector<32x16xf32>
    %c0_11 = arith.constant 0 : index
    %c0_12 = arith.constant 0 : index
    %c0_13 = arith.constant 0 : index
    %28 = vector.load %arg5[%c0_11, %c0_12, %c0_13] : memref<1x32x16xf32, #tpu.memory_space<vmem>>, vector<1x32x16xf32>
    %29 = vector.shape_cast %28 : vector<1x32x16xf32> to vector<32x16xf32>
    %30 = vector.shape_cast %27 : vector<32x16xf32> to vector<1x32x16xf32>
    tpu.vector_store %arg5[%c0_11, %c0_12, %c0_13], %30 {strides = array<i32>} : memref<1x32x16xf32, #tpu.memory_space<vmem>>, vector<1x32x16xf32>,
    return
  }
  func.func @transform_0(%arg0: i32, %arg1: i32) -> (i32, i32, i32) {
    %c0_i32 = arith.constant 0 : i32
    %c0_i32_0 = arith.constant 0 : i32
    return %arg0, %c0_i32, %arg1 : i32, i32, i32
  }
  func.func @transform_1(%arg0: i32, %arg1: i32) -> (i32, i32) {
    %c0_i32 = arith.constant 0 : i32
    %c0_i32_0 = arith.constant 0 : i32
    %c0_i32_1 = arith.constant 0 : i32
    return %c0_i32, %c0_i32_0 : i32, i32
  }
  func.func @transform_2(%arg0: i32, %arg1: i32) -> (i32, i32) {
    %c0_i32 = arith.constant 0 : i32
    %c0_i32_0 = arith.constant 0 : i32
    %c0_i32_1 = arith.constant 0 : i32
    return %c0_i32, %c0_i32_0 : i32, i32
  }
  func.func @transform_3(%arg0: i32, %arg1: i32) -> (i32, i32, i32) {
    %c0_i32 = arith.constant 0 : i32
    %c0_i32_0 = arith.constant 0 : i32
    return %arg0, %c0_i32, %arg1 : i32, i32, i32
  }
}

</mosaic_0001>

<llo_original>
// kernel: tpu_custom_call.1
$region0: #{tpu_custom_call.1}
  #allocation0 [shape = 'u32[]', space=smem, size = 0x4, offset = 0x4, fixed_abs, tag = 'smem constant byte address 0x4 - core index']
  #allocation1 [shape = 'u32[144,128]{1,0:T(1,128)}', space=vmem, size = 0x12000, scoped, tag = 'internal scratch']
  %s0 = inlined_call_operand.vmem [shape: f32[2,32,16], index: 0, kind: input, shape index: {}]
  %s1 = inlined_call_operand.vmem [shape: f32[32,1], index: 1, kind: input, shape index: {}]
  %s2 = inlined_call_operand.vmem [shape: f32[32,1], index: 2, kind: input, shape index: {}]
  %s3 = inlined_call_operand.vmem [shape: f32[2,32,16], index: 3, kind: output, shape index: {}]
  %s4 = sld [smem:[#allocation0]]
  $region45: #{tpu_custom_call.1} parent=0
    _
  %s6 = ssub.s32 1, %s4
  %s7 = scalar_select 0, %s6, %s4
  loop: start=0, step=1, limit=4
  $region2: #{tpu_custom_call.1} parent=0 // loop_pre_header
    _
  $region3: #{tpu_custom_call.1} parent=0 // loop_header
    %s9 = sphi 0, %s13
    %p10 = scmp.ge.s32.totalorder %s9, 4
    %s16 = sphi 0, %s28
    %s17 = sphi 0, %s24
    %s18 = sphi 0, %s16
    %s19 = sphi 0, %s17
    %s20 = sphi 0, %s18
    %s21 = sphi 0, %s19
    %s33 = sphi 0, %s35
    %s36 = sphi 0, %s33
    %s37 = sphi 0, %s36
    %s53 = sphi 0, %s37
    %s57 = sphi 0, %s57
    %s59 = sphi 0, %s57
    %s60 = sphi 0, %s59
    %s74 = sphi 0, %s60
    %s78 = sphi 0, %s78
    %s80 = sphi 0, %s78
    %s81 = sphi 0, %s80
    %s95 = sphi 0, %s81
    %s103 = sphi 0, %s105
    %s106 = sphi 0, %s103
    %s107 = sphi 0, %s106
    %s123 = sphi 0, %s107
  $region4: #{tpu_custom_call.1} parent=0 // loop_header_branch
    %12 = sbr.rel (%p10) target = $region8
  $region5: #{tpu_custom_call.1} parent=0 // loop_body
    %s14 = ssub.s32 %s9, 1
    %s15 = ssub.s32 %s9, 2
    %s22 = sadd.s32 1, %s17
    %p23 = scmp.ge.s32.totalorder %s22, 1
    %s24 = scalar_select %p23, 0, %s22
    %s25 = sadd.s32 1, %s16
    %s26 = scalar_select %p23, %s25, %s16
    %p27 = scmp.ge.s32.totalorder %s26, 2
    %s28 = scalar_select %p27, 0, %s26
    %s29 = ssub.s32 %s16, %s28
    %s30 = ssub.s32 %s17, %s24
    %s31 = sor.u32 %s29, %s30
    %p32 = scmp.eq.s32.totalorder %s31, 0
    %s34 = sadd.s32 %s33, 1
    %s35 = scalar_select %p32, %s33, %s34
    %p38 = pneg %p32
    %p39 = scmp.eq.s32.totalorder %s9, 1
    %p40 = por %p38, %p39
    %p41 = scmp.ne.s32.totalorder %s33, %s36
    %p42 = scmp.eq.s32.totalorder %s9, 0
    %p43 = por %p41, %p42
    %p44 = scmp.ne.s32.totalorder %s33, %s36
    %p45 = scmp.eq.s32.totalorder %s14, 1
    %p46 = por %p44, %p45
    %p47 = scmp.ne.s32.totalorder %s36, %s37
    %p48 = scmp.eq.s32.totalorder %s14, 0
    %p49 = por %p47, %p48
    %p50 = scmp.ne.s32.totalorder %s36, %s37
    %p51 = scmp.eq.s32.totalorder %s15, 1
    %p52 = por %p50, %p51
    %p54 = scmp.ne.s32.totalorder %s37, %s53
    %p55 = scmp.eq.s32.totalorder %s15, 0
    %p56 = por %p54, %p55
    %s58 = sadd.s32 %s57, 1
    %p61 = scmp.eq.s32.totalorder %s9, 1
    %p62 = scmp.ne.s32.totalorder %s57, %s59
    %p63 = scmp.eq.s32.totalorder %s9, 0
    %p64 = por %p62, %p63
    %p65 = scmp.ne.s32.totalorder %s57, %s59
    %p66 = scmp.eq.s32.totalorder %s14, 1
    %p67 = por %p65, %p66
    %p68 = scmp.ne.s32.totalorder %s59, %s60
    %p69 = scmp.eq.s32.totalorder %s14, 0
    %p70 = por %p68, %p69
    %p71 = scmp.ne.s32.totalorder %s59, %s60
    %p72 = scmp.eq.s32.totalorder %s15, 1
    %p73 = por %p71, %p72
    %p75 = scmp.ne.s32.totalorder %s60, %s74
    %p76 = scmp.eq.s32.totalorder %s15, 0
    %p77 = por %p75, %p76
    %s79 = sadd.s32 %s78, 1
    %p82 = scmp.eq.s32.totalorder %s9, 1
    %p83 = scmp.ne.s32.totalorder %s78, %s80
    %p84 = scmp.eq.s32.totalorder %s9, 0
    %p85 = por %p83, %p84
    %p86 = scmp.ne.s32.totalorder %s78, %s80
    %p87 = scmp.eq.s32.totalorder %s14, 1
    %p88 = por %p86, %p87
    %p89 = scmp.ne.s32.totalorder %s80, %s81
    %p90 = scmp.eq.s32.totalorder %s14, 0
    %p91 = por %p89, %p90
    %p92 = scmp.ne.s32.totalorder %s80, %s81
    %p93 = scmp.eq.s32.totalorder %s15, 1
    %p94 = por %p92, %p93
    %p96 = scmp.ne.s32.totalorder %s81, %s95
    %p97 = scmp.eq.s32.totalorder %s15, 0
    %p98 = por %p96, %p97
    %s99 = ssub.s32 %s16, %s28
    %s100 = ssub.s32 %s17, %s24
    %s101 = sor.u32 %s99, %s100
    %p102 = scmp.eq.s32.totalorder %s101, 0
    %s104 = sadd.s32 %s103, 1
    %s105 = scalar_select %p102, %s103, %s104
    %p108 = pneg %p102
    %p109 = scmp.eq.s32.totalorder %s9, 1
    %p110 = por %p108, %p109
    %p111 = scmp.ne.s32.totalorder %s103, %s106
    %p112 = scmp.eq.s32.totalorder %s9, 0
    %p113 = por %p111, %p112
    %p114 = scmp.ne.s32.totalorder %s103, %s106
    %p115 = scmp.eq.s32.totalorder %s14, 1
    %p116 = por %p114, %p115
    %p117 = scmp.ne.s32.totalorder %s106, %s107
    %p118 = scmp.eq.s32.totalorder %s14, 0
    %p119 = por %p117, %p118
    %p120 = scmp.ne.s32.totalorder %s106, %s107
    %p121 = scmp.eq.s32.totalorder %s15, 1
    %p122 = por %p120, %p121
    %p124 = scmp.ne.s32.totalorder %s107, %s123
    %p125 = scmp.eq.s32.totalorder %s15, 0
    %p126 = por %p124, %p125
    %p127 = scmp.le.s32.totalorder 1, %s9
    %p128 = scmp.lt.s32.totalorder %s9, 3
    %p129 = pnand %p127, %p128
    %p130 = pneg %p129
    // Predicated region
    $region9: #{tpu_custom_call.1} parent=5 // pred_check
      _
    $region10: #{tpu_custom_call.1} parent=5 // pred_check_branch
      %132 = sbr.rel (%p129) target = $region12
    $region11: #{tpu_custom_call.1} parent=5 // pred_region
      %s133 = ssub.s32 %s9, 1
      // Predicated region
      $region13: #{tpu_custom_call.1} parent=11 // pred_check
        %p134 = pneg %p70
      $region14: #{tpu_custom_call.1} parent=11 // pred_check_branch
        %136 = sbr.rel (%p134) target = $region16
      $region15: #{tpu_custom_call.1} parent=11 // pred_region
        _
      $region16: #{tpu_custom_call.1} parent=11 // pred_fallthru
        _
      // Predicated region
      $region17: #{tpu_custom_call.1} parent=11 // pred_check
        %p137 = pneg %p91
      $region18: #{tpu_custom_call.1} parent=11 // pred_check_branch
        %139 = sbr.rel (%p137) target = $region20
      $region19: #{tpu_custom_call.1} parent=11 // pred_region
        _
      $region20: #{tpu_custom_call.1} parent=11 // pred_fallthru
        _
    $region12: #{tpu_custom_call.1} parent=5 // pred_fallthru
      _
    %p140 = scmp.lt.s32.totalorder %s9, 2
    // Predicated region
    $region21: #{tpu_custom_call.1} parent=5 // pred_check
      %p141 = pneg %p140
    $region22: #{tpu_custom_call.1} parent=5 // pred_check_branch
      %143 = sbr.rel (%p141) target = $region24
    $region23: #{tpu_custom_call.1} parent=5 // pred_region
      // Predicated region
      $region25: #{tpu_custom_call.1} parent=23 // pred_check
        %p144 = pneg %p43
      $region26: #{tpu_custom_call.1} parent=23 // pred_check_branch
        %146 = sbr.rel (%p144) target = $region28
      $region27: #{tpu_custom_call.1} parent=23 // pred_region
        %p147 = scmp.lt.s32.totalorder %s16, 1
        %s148 = scalar_select %p147, %s16, 1
        %p149 = scmp.lt.s32.totalorder %s17, 0
        %s150 = scalar_select %p149, %s17, 0
        %s151 = smul.addr %s148, 4
        %s152 = sadd.s32 %s150, %s151
        %s153 = smul.addr %s152, 8
        %s154 = scalar_lea.vmem %s0, %s153
      $region28: #{tpu_custom_call.1} parent=23 // pred_fallthru
        _
    $region24: #{tpu_custom_call.1} parent=5 // pred_fallthru
      _
    %p155 = scmp.le.s32.totalorder 1, %s9
    %p156 = scmp.lt.s32.totalorder %s9, 3
    %p157 = pnand %p155, %p156
    %p158 = pneg %p157
    // Predicated region
    $region29: #{tpu_custom_call.1} parent=5 // pred_check
      _
    $region30: #{tpu_custom_call.1} parent=5 // pred_check_branch
      %160 = sbr.rel (%p157) target = $region32
    $region31: #{tpu_custom_call.1} parent=5 // pred_region
      %s161 = ssub.s32 %s9, 1
      %p162 = scmp.lt.s32.totalorder %s18, 1
      %s163 = scalar_select %p162, %s18, 1
      %p164 = scmp.lt.s32.totalorder %s19, 0
      %s165 = scalar_select %p164, %s19, 0
      %s166 = smul.addr %s163, 4
      %s167 = sadd.s32 %s165, %s166
      %s168 = smul.addr %s167, 8
      %s169 = scalar_lea.vmem %s0, %s168
      %p170 = pneg %p49
      %p171 = pneg %p46
      %p172 = pneg %p70
      %p173 = pneg %p67
      %p174 = pneg %p91
      %p175 = pneg %p88
      %p176 = pneg %p119
      %p177 = pneg %p116
      %p178 = scmp.lt.s32.totalorder %s18, 1
      %s179 = scalar_select %p178, %s18, 1
      %p180 = scmp.lt.s32.totalorder %s19, 0
      %s181 = scalar_select %p180, %s19, 0
      %s182 = smul.addr %s179, 4
      %s183 = sadd.s32 %s181, %s182
      %s184 = smul.addr %s183, 8
      %s185 = scalar_lea.vmem %s3, %s184
      %p186 = scmp.lt.s32.totalorder %s18, 1
      %s187 = scalar_select %p186, %s18, 1
      %p188 = scmp.lt.s32.totalorder %s19, 0
      %s189 = scalar_select %p188, %s19, 0
      %s190 = smul.addr %s187, 4
      %s191 = sadd.s32 %s189, %s190
      %s192 = smul.addr %s191, 8
      %s193 = scalar_lea.vmem %s0, %s192
      %p194 = scmp.lt.s32.totalorder %s18, 1
      %s195 = scalar_select %p194, %s18, 1
      %p196 = scmp.lt.s32.totalorder %s19, 0
      %s197 = scalar_select %p196, %s19, 0
      %s198 = smul.addr %s195, 4
      %s199 = sadd.s32 %s197, %s198
      %s200 = smul.addr %s199, 8
      %s201 = scalar_lea.vmem %s3, %s200
      %v202 = vld [vmem:[%s193] sm:$0xff]
      %v203 = vld [vmem:[%s193 + $0x8] sm:$0xff]
      %v204 = vld [vmem:[%s193 + $0x10] sm:$0xff]
      %v205 = vld [vmem:[%s193 + $0x18] sm:$0xff]
      %vm206 = vcmask 130048
      %v207 = vsel %vm206, %v202, 0.0
      %v208 = vsel %vm206, %v203, 0.0
      %v209 = vadd.f32 %v207, %v208
      %v210 = vsel %vm206, %v204, 0.0
      %v211 = vadd.f32 %v209, %v210
      %v212 = vsel %vm206, %v205, 0.0
      %v213 = vadd.f32 %v211, %v212
      %v214 = vrot.slane %v213, 4
      %v215 = vadd.f32 %v213, %v214
      %v216 = vrot.slane %v215, 2
      %v217 = vadd.f32 %v215, %v216
      %v218 = vrot.slane %v217, 1
      %v219 = vadd.f32 %v217, %v218
      %v220 = vmul.f32 %v202, %v202
      %v221 = vmul.f32 %v203, %v203
      %v222 = vmul.f32 %v204, %v204
      %v223 = vmul.f32 %v205, %v205
      %v224 = vsel %vm206, %v220, 0.0
      %v225 = vsel %vm206, %v221, 0.0
      %v226 = vadd.f32 %v224, %v225
      %v227 = vsel %vm206, %v222, 0.0
      %v228 = vadd.f32 %v226, %v227
      %v229 = vsel %vm206, %v223, 0.0
      %v230 = vadd.f32 %v228, %v229
      %v231 = vrot.slane %v230, 4
      %v232 = vadd.f32 %v230, %v231
      %v233 = vrot.slane %v232, 2
      %v234 = vadd.f32 %v232, %v233
      %v235 = vrot.slane %v234, 1
      %v236 = vadd.f32 %v234, %v235
      %v237 = vmul.f32 %v219, 0.03125
      %v238 = vmul.f32 %v236, 0.03125
      %v239 = vmul.f32 %v237, %v237
      %v240 = vsub.f32 %v238, %v239
      %v241 = vmax.f32 %v240, 0.0
      %v242 = vadd.f32 %v241, 1e-05
      %v243 = vrsqrt.pop %v242
      %v244 = vsub.f32 %v202, %v237
      %v245 = vsub.f32 %v203, %v237
      %v246 = vsub.f32 %v204, %v237
      %v247 = vsub.f32 %v205, %v237
      %v248 = vmul.f32 %v244, %v243
      %v249 = vmul.f32 %v245, %v243
      %v250 = vmul.f32 %v246, %v243
      %v251 = vmul.f32 %v247, %v243
      %v252 = vld [vmem:[%s1] sm:$0xff]
      %v253 = vld [vmem:[%s1 + $0x8] sm:$0xff]
      %v254 = vld [vmem:[%s1 + $0x10] sm:$0xff]
      %v255 = vld [vmem:[%s1 + $0x18] sm:$0xff]
      %257 = vset.pattern.permute.xlu0 0
      %258 = vperm.xlu0 %257, %v252
      %v259 = vpop.permute.xlu0 %258
      %262 = vset.pattern.permute.xlu0 0
      %263 = vperm.xlu0 %262, %v253
      %v264 = vpop.permute.xlu0 %263
      %267 = vset.pattern.permute.xlu0 0
      %268 = vperm.xlu0 %267, %v254
      %v269 = vpop.permute.xlu0 %268
      %272 = vset.pattern.permute.xlu0 0
      %273 = vperm.xlu0 %272, %v255
      %v274 = vpop.permute.xlu0 %273
      %v276 = vmul.f32 %v248, %v259
      %v277 = vmul.f32 %v249, %v264
      %v278 = vmul.f32 %v250, %v269
      %v279 = vmul.f32 %v251, %v274
      %v280 = vld [vmem:[%s2] sm:$0xff]
      %v281 = vld [vmem:[%s2 + $0x8] sm:$0xff]
      %v282 = vld [vmem:[%s2 + $0x10] sm:$0xff]
      %v283 = vld [vmem:[%s2 + $0x18] sm:$0xff]
      %285 = vset.pattern.permute.xlu0 0
      %286 = vperm.xlu0 %285, %v280
      %v287 = vpop.permute.xlu0 %286
      %290 = vset.pattern.permute.xlu0 0
      %291 = vperm.xlu0 %290, %v281
      %v292 = vpop.permute.xlu0 %291
      %295 = vset.pattern.permute.xlu0 0
      %296 = vperm.xlu0 %295, %v282
      %v297 = vpop.permute.xlu0 %296
      %300 = vset.pattern.permute.xlu0 0
      %301 = vperm.xlu0 %300, %v283
      %v302 = vpop.permute.xlu0 %301
      %v304 = vadd.f32 %v276, %v287
      %v305 = vadd.f32 %v277, %v292
      %v306 = vadd.f32 %v278, %v297
      %v307 = vadd.f32 %v279, %v302
      %308 = vst.msk [vmem:[%s201] sm:$0xff] %vm206, %v304
      %309 = vst.msk [vmem:[%s201 + $0x8] sm:$0xff] %vm206, %v305
      %310 = vst.msk [vmem:[%s201 + $0x10] sm:$0xff] %vm206, %v306
      %311 = vst.msk [vmem:[%s201 + $0x18] sm:$0xff] %vm206, %v307
      %p312 = scmp.lt.s32.totalorder %s18, 1
      %s313 = scalar_select %p312, %s18, 1
      %p314 = scmp.lt.s32.totalorder %s19, 0
      %s315 = scalar_select %p314, %s19, 0
      %s316 = smul.addr %s313, 4
      %s317 = sadd.s32 %s315, %s316
      %s318 = smul.addr %s317, 8
      %s319 = scalar_lea.vmem %s3, %s318
      // Predicated region
      $region33: #{tpu_custom_call.1} parent=31 // pred_check
        %p320 = pneg %p116
      $region34: #{tpu_custom_call.1} parent=31 // pred_check_branch
        %322 = sbr.rel (%p320) target = $region36
      $region35: #{tpu_custom_call.1} parent=31 // pred_region
        _
      $region36: #{tpu_custom_call.1} parent=31 // pred_fallthru
        _
    $region32: #{tpu_custom_call.1} parent=5 // pred_fallthru
      _
    %p323 = scmp.le.s32.totalorder 2, %s9
    // Predicated region
    $region37: #{tpu_custom_call.1} parent=5 // pred_check
      %p324 = pneg %p323
    $region38: #{tpu_custom_call.1} parent=5 // pred_check_branch
      %326 = sbr.rel (%p324) target = $region40
    $region39: #{tpu_custom_call.1} parent=5 // pred_region
      %s327 = ssub.s32 %s9, 2
      // Predicated region
      $region41: #{tpu_custom_call.1} parent=39 // pred_check
        %p328 = pneg %p122
      $region42: #{tpu_custom_call.1} parent=39 // pred_check_branch
        %330 = sbr.rel (%p328) target = $region44
      $region43: #{tpu_custom_call.1} parent=39 // pred_region
        %p331 = scmp.lt.s32.totalorder %s20, 1
        %s332 = scalar_select %p331, %s20, 1
        %p333 = scmp.lt.s32.totalorder %s21, 0
        %s334 = scalar_select %p333, %s21, 0
        %s335 = smul.addr %s332, 4
        %s336 = sadd.s32 %s334, %s335
        %s337 = smul.addr %s336, 8
        %s338 = scalar_lea.vmem %s3, %s337
      $region44: #{tpu_custom_call.1} parent=39 // pred_fallthru
        _
    $region40: #{tpu_custom_call.1} parent=5 // pred_fallthru
      _
  $region6: #{tpu_custom_call.1} parent=0 // loop_footer
    %s13 = sadd.s32 1, %s9
  $region7: #{tpu_custom_call.1} parent=0 // loop_footer_branch
    %8 = sbr.rel target = $region3
  $region8: #{tpu_custom_call.1} parent=0 // loop_exit
    _

</llo_original>
